<compile_context>
chip_gen: v7x
topology: tpu7x:2x2x1
jax: 0.10.0
libtpu: 0.0.40
codegen_flags: <defaults>
</compile_context>

<pallas_src>
import jax
import jax.numpy as jnp
from jax.experimental import pallas as pl
from jax.experimental.pallas import tpu as pltpu

NUM_LEVELS = 5          # 'excellent', 'good', 'fair', 'poor', 'bad'
LEVEL_PAD = 128         # pad the 5 preferential logits to a full lane vreg
MIN_BLOCK_B = 16        # bf16 sublane packing (16 rows per packed sublane tile)
MAX_BLOCK_B = 256       # MXU row dimension on v6e/v7x


def _round_up(x, m):
    return ((x + m - 1) // m) * m


def _choose_block_b(batch):
    # >=16 rows (bf16 sublane packing), <=256 rows (MXU row occupancy), and
    # ~batch/2 per block so mid/large batches give >=2 "parallel" grid steps
    # (both v7x TensorCores get work; neutral on single-TC v5e/v6e).
    return max(MIN_BLOCK_B, min(MAX_BLOCK_B, _round_up(pl.cdiv(batch, 2), MIN_BLOCK_B)))


def qalign_score_kernel(x_ref, w1_ref, b1_ref, wsel_ref, out_ref):
    """MLP -> pre-gathered LM-head dot -> masked softmax -> weighted score.

    x_ref:    (BB, D)                 bf16 pooled video features
    w1_ref:   (D, H)                  bf16 synthetic backbone weight
    b1_ref:   (1, H)                  f32 synthetic backbone bias
    wsel_ref: (H, LEVEL_PAD)          bf16 LM-head columns at the 5 pref ids (zero-padded)
    out_ref:  (2, BB, LEVEL_PAD) f32  [0]=logits, [1]=probs (+ score in lane NUM_LEVELS)
    """
    # synthetic "model" producing a last-token hidden state (f32 accumulation)
    h_pre = (jnp.dot(x_ref[...], w1_ref[...], preferred_element_type=jnp.float32)
             + b1_ref[...])                                        # (BB, H) f32
    # bf16 tanh rides the bf16 EUP on v6e/v7x and feeds the bf16 MXU dot directly.
    # TODO(synk): on v5e (no bf16 EUP/VPU) an f32 tanh would be preferable.
    h = jnp.tanh(h_pre.astype(jnp.bfloat16))                       # (BB, H) bf16

    # == output['logits'][:, -1, preferential_ids_] of the real model:
    # LM-head columns were pre-gathered on the host, so one small dot suffices.
    logits_sel = jnp.dot(h, wsel_ref[...],
                         preferred_element_type=jnp.float32)       # (BB, LEVEL_PAD)

    # masked softmax over the 5 valid lanes (exp(-inf) == 0 exactly for pads);
    # exact divide so probs sum to 1 like torch.softmax.
    lane = jax.lax.broadcasted_iota(jnp.int32, logits_sel.shape, 1)
    valid = lane < NUM_LEVELS
    masked = jnp.where(valid, logits_sel, -jnp.inf)
    m = jnp.max(masked, axis=-1, keepdims=True)
    e = jnp.exp(masked - m)                                        # padded lanes -> 0
    denom = jnp.sum(e, axis=-1, keepdims=True)
    probs = e / denom

    # weight_tensor = [1, 0.75, 0.5, 0.25, 0.0]  ==  (4 - lane) / 4 on valid lanes
    wts = jnp.where(valid,
                    (NUM_LEVELS - 1 - lane).astype(jnp.float32) * (1.0 / (NUM_LEVELS - 1)),
                    0.0)
    score = jnp.sum(probs * wts, axis=-1, keepdims=True)           # (BB, 1)

    out_ref[0, ...] = logits_sel
    # pack the scalar score into the (otherwise-zero) lane NUM_LEVELS of the
    # probs plane -> only two lane-dense, unmasked output planes.
    out_ref[1, ...] = jnp.where(lane == NUM_LEVELS, score, probs)


def prepare_params(params):
    """One-time weight preprocessing (hoisted out of the per-call path)."""
    w1, b1, wlm, pref_ids = (params["w1"], params["b1"], params["wlm"],
                             params["pref_ids"])
    Hdim = w1.shape[1]
    # exact column gather of the 5 preferential LM-head columns (in f32),
    # zero-padded to a full lane vreg, then shipped as bf16.
    wlm_sel = (jnp.zeros((Hdim, LEVEL_PAD), jnp.float32)
               .at[:, :NUM_LEVELS].set(wlm[:, pref_ids].astype(jnp.float32))
               .astype(jnp.bfloat16))
    return {"w1": w1.astype(jnp.bfloat16),
            "b1": b1.reshape(1, Hdim).astype(jnp.float32),
            "wlm_sel": wlm_sel}


def qalign_video_scorer(pixel_values, prepped):
    """pixel_values: (B, T, C, H, W) float32.  Returns (logits, probs, score)."""
    B, T, C, H, W = pixel_values.shape
    w1, b1, wlm_sel = prepped["w1"], prepped["b1"], prepped["wlm_sel"]
    Hdim = w1.shape[1]

    # ---- glue: image "preprocessing" (mean-pool each frame to 4x4, flatten) ----
    # TODO(synk): PIL expand2square / CLIP image_processor.preprocess and the
    # mplug_owl2 backbone are host-side / external; replaced by average pooling
    # plus the synthetic tanh-MLP "model" above.
    assert H % 4 == 0 and W % 4 == 0
    pooled = pixel_values.reshape(B, T, C, 4, H // 4, 4, W // 4).mean(axis=(4, 6))
    feats = pooled.reshape(B, -1)                                  # (B, D) f32
    D = feats.shape[-1]
    assert w1.shape[0] == D

    block_b = _choose_block_b(B)
    n_blocks = pl.cdiv(B, block_b)
    Bp = n_blocks * block_b

    x = feats.astype(jnp.bfloat16)
    if Bp != B:
        # only a ragged tail block pays a pad copy; full-block batches don't
        x = jnp.pad(x, ((0, Bp - B), (0, 0)))

    cost = pl.CostEstimate(
        flops=2 * Bp * (D * Hdim + Hdim * LEVEL_PAD),
        transcendentals=Bp * (Hdim + LEVEL_PAD),                   # tanh + exp
        bytes_accessed=(Bp * D * 2                                 # activations
                        + w1.size * 2 + b1.size * 4 + wlm_sel.size * 2  # weights (resident, read once)
                        + 2 * Bp * LEVEL_PAD * 4),                 # output slab
    )

    slab = pl.pallas_call(
        qalign_score_kernel,
        grid=(n_blocks,),
        in_specs=[
            pl.BlockSpec((block_b, D), lambda i: (i, 0)),
            pl.BlockSpec((D, Hdim), lambda i: (0, 0)),
            pl.BlockSpec((1, Hdim), lambda i: (0, 0)),
            pl.BlockSpec((Hdim, LEVEL_PAD), lambda i: (0, 0)),
        ],
        out_specs=pl.BlockSpec((2, block_b, LEVEL_PAD), lambda i: (0, i, 0)),
        out_shape=jax.ShapeDtypeStruct((2, Bp, LEVEL_PAD), jnp.float32),
        compiler_params=pltpu.CompilerParams(
            dimension_semantics=("parallel",)),
        cost_estimate=cost,
    )(x, w1, b1, wlm_sel)

    logits = slab[0, :B, :NUM_LEVELS]
    probs = slab[1, :B, :NUM_LEVELS]
    score = slab[1, :B, NUM_LEVELS]
    return logits, probs, score


def make_params(key, D, Hdim, V):
    k1, k2, k3 = jax.random.split(key, 3)
    w1 = jax.random.normal(k1, (D, Hdim), jnp.float32) * 0.05
    b1 = jax.random.normal(k2, (Hdim,), jnp.float32) * 0.01
    wlm = jax.random.normal(k3, (Hdim, V), jnp.float32) * 0.05
    # synthetic "tokenizer" ids for ['excellent','good','fair','poor','bad']
    pref_ids = jnp.array([37, 101, 7, 200, 13], jnp.int32)
    weight_tensor = jnp.array([1.0, 0.75, 0.5, 0.25, 0.0], jnp.float32)
    return {"w1": w1, "b1": b1, "wlm": wlm,
            "pref_ids": pref_ids, "weight_tensor": weight_tensor}


if __name__ == "__main__":
    key = jax.random.PRNGKey(0)
    kp, kx = jax.random.split(key)

    # small shapes: 2 videos, 4 frames each, 3x16x16 frames (NTCHW)
    B, T, C, H, W = 2, 4, 3, 16, 16
    D = T * C * 4 * 4           # pooled feature dim = 192
    Hdim, V = 128, 256          # synthetic hidden size / vocab size

    pixel_values = jax.random.normal(kx, (B, T, C, H, W), jnp.float32)
    params = make_params(kp, D, Hdim, V)
    prepped = prepare_params(params)    # one-time weight gather / pad / casts

    logits, probs, score = qalign_video_scorer(pixel_values, prepped)
    jax.block_until_ready((logits, probs, score))

    assert logits.shape == (B, NUM_LEVELS)
    assert probs.shape == (B, NUM_LEVELS)
    assert score.shape == (B,)
    # exact divide -> softmax sums to 1 up to f32 rounding
    assert bool(jnp.all(jnp.abs(jnp.sum(probs, axis=-1) - 1.0) < 1e-3))
    assert bool(jnp.all((score >= -1e-3) & (score <= 1.0 + 1e-3)))
    # kernel score matches probs @ weight_tensor
    ref_score = probs @ params["weight_tensor"]
    assert bool(jnp.all(jnp.abs(score - ref_score) < 1e-4))

    print("KERNEL_OK")
</pallas_src>

<mosaic_0001>
module attributes {stable_mosaic.version = 11 : i64} {
  func.func @qalign_score_kernel(%arg0: i32, %arg1: memref<16x192xbf16, #tpu.memory_space<vmem>>, %arg2: memref<192x128xbf16, #tpu.memory_space<vmem>>, %arg3: memref<1x128xf32, #tpu.memory_space<vmem>>, %arg4: memref<128x128xbf16, #tpu.memory_space<vmem>>, %arg5: memref<2x16x128xf32, #tpu.memory_space<vmem>>) attributes {dimension_semantics = [#tpu.dimension_semantics<parallel>], iteration_bounds = array<i64: 1>, scalar_prefetch = 0 : i64, scratch_operands = 0 : i64, tpu.core_type = #tpu.core_type<tc>, window_params = [{transform_indices = @transform_0, window_bounds = array<i64: 16, 192>}, {pipeline_mode = #tpu.pipeline_mode<synchronous>, transform_indices = @transform_1, window_bounds = array<i64: 192, 128>}, {pipeline_mode = #tpu.pipeline_mode<synchronous>, transform_indices = @transform_2, window_bounds = array<i64: 1, 128>}, {pipeline_mode = #tpu.pipeline_mode<synchronous>, transform_indices = @transform_3, window_bounds = array<i64: 128, 128>}, {transform_indices = @transform_4, window_bounds = array<i64: 2, 16, 128>}]} {
    %c0 = arith.constant 0 : index
    %c0_0 = arith.constant 0 : index
    %0 = vector.load %arg1[%c0, %c0_0] : memref<16x192xbf16, #tpu.memory_space<vmem>>, vector<16x192xbf16>
    %c0_1 = arith.constant 0 : index
    %c0_2 = arith.constant 0 : index
    %1 = vector.load %arg2[%c0_1, %c0_2] : memref<192x128xbf16, #tpu.memory_space<vmem>>, vector<192x128xbf16>
    %cst = arith.constant dense<0.000000e+00> : vector<16x128xf32>
    %2 = tpu.matmul %0, %1, %cst {dimension_numbers = #tpu.dot_dimension_numbers<[1], [0], [0], [1], [0, 0, 1, 1], [], []>} : vector<16x192xbf16>, vector<192x128xbf16>, vector<16x128xf32> -> vector<16x128xf32>
    %c0_3 = arith.constant 0 : index
    %c0_4 = arith.constant 0 : index
    %3 = vector.load %arg3[%c0_3, %c0_4] : memref<1x128xf32, #tpu.memory_space<vmem>>, vector<1x128xf32>
    %4 = vector.broadcast %3 : vector<1x128xf32> to vector<16x128xf32>
    %5 = arith.addf %2, %4 : vector<16x128xf32>
    %6 = arith.truncf %5 : vector<16x128xf32> to vector<16x128xbf16>
    %7 = math.tanh %6 : vector<16x128xbf16>
    %c0_5 = arith.constant 0 : index
    %c0_6 = arith.constant 0 : index
    %8 = vector.load %arg4[%c0_5, %c0_6] : memref<128x128xbf16, #tpu.memory_space<vmem>>, vector<128x128xbf16>
    %cst_7 = arith.constant dense<0.000000e+00> : vector<16x128xf32>
    %9 = tpu.matmul %7, %8, %cst_7 {dimension_numbers = #tpu.dot_dimension_numbers<[1], [0], [0], [1], [0, 0, 1, 1], [], []>} : vector<16x128xbf16>, vector<128x128xbf16>, vector<16x128xf32> -> vector<16x128xf32>
    %10 = tpu.iota {dimensions = array<i32: 1>} : vector<16x128xi32>
    %c5_i32 = arith.constant 5 : i32
    %11 = vector.broadcast %c5_i32 : i32 to vector<16x128xi32>
    %12 = arith.cmpi slt, %10, %11 : vector<16x128xi32>
    %cst_8 = arith.constant 0xFF800000 : f32
    %13 = vector.broadcast %cst_8 : f32 to vector<16x128xf32>
    %14 = arith.select %12, %9, %13 : vector<16x128xi1>, vector<16x128xf32>
    %cst_9 = arith.constant dense<0xFF800000> : vector<16xf32>
    %15 = vector.multi_reduction <maximumf>, %14, %cst_9 [1] : vector<16x128xf32> to vector<16xf32>
    %16 = vector.shape_cast %15 : vector<16xf32> to vector<16x1xf32>
    %17 = vector.broadcast %16 : vector<16x1xf32> to vector<16x128xf32>
    %18 = arith.subf %14, %17 : vector<16x128xf32>
    %19 = math.exp %18 : vector<16x128xf32>
    %cst_10 = arith.constant dense<0.000000e+00> : vector<16xf32>
    %20 = vector.multi_reduction <add>, %19, %cst_10 [1] : vector<16x128xf32> to vector<16xf32>
    %21 = vector.shape_cast %20 : vector<16xf32> to vector<16x1xf32>
    %22 = vector.broadcast %21 : vector<16x1xf32> to vector<16x128xf32>
    %23 = arith.divf %19, %22 : vector<16x128xf32>
    %c4_i32 = arith.constant 4 : i32
    %24 = vector.broadcast %c4_i32 : i32 to vector<16x128xi32>
    %25 = arith.subi %24, %10 : vector<16x128xi32>
    %26 = arith.sitofp %25 : vector<16x128xi32> to vector<16x128xf32>
    %cst_11 = arith.constant 2.500000e-01 : f32
    %27 = vector.broadcast %cst_11 : f32 to vector<16x128xf32>
    %28 = arith.mulf %26, %27 : vector<16x128xf32>
    %cst_12 = arith.constant 0.000000e+00 : f32
    %29 = vector.broadcast %cst_12 : f32 to vector<16x128xf32>
    %30 = arith.select %12, %28, %29 : vector<16x128xi1>, vector<16x128xf32>
    %31 = arith.mulf %23, %30 : vector<16x128xf32>
    %cst_13 = arith.constant dense<0.000000e+00> : vector<16xf32>
    %32 = vector.multi_reduction <add>, %31, %cst_13 [1] : vector<16x128xf32> to vector<16xf32>
    %33 = vector.shape_cast %32 : vector<16xf32> to vector<16x1xf32>
    %c0_14 = arith.constant 0 : index
    %c0_15 = arith.constant 0 : index
    %c0_16 = arith.constant 0 : index
    %34 = vector.load %arg5[%c0_14, %c0_15, %c0_16] : memref<2x16x128xf32, #tpu.memory_space<vmem>>, vector<1x16x128xf32>
    %35 = vector.shape_cast %34 : vector<1x16x128xf32> to vector<16x128xf32>
    %36 = vector.shape_cast %9 : vector<16x128xf32> to vector<1x16x128xf32>
    tpu.vector_store %arg5[%c0_14, %c0_15, %c0_16], %36 {strides = array<i32>} : memref<2x16x128xf32, #tpu.memory_space<vmem>>, vector<1x16x128xf32>,
    %c5_i32_17 = arith.constant 5 : i32
    %37 = vector.broadcast %c5_i32_17 : i32 to vector<16x128xi32>
    %38 = arith.cmpi eq, %10, %37 : vector<16x128xi32>
    %39 = vector.shape_cast %33 : vector<16x1xf32> to vector<16x1xf32>
    %40 = vector.broadcast %39 : vector<16x1xf32> to vector<16x128xf32>
    %41 = arith.select %38, %40, %23 : vector<16x128xi1>, vector<16x128xf32>
    %c1 = arith.constant 1 : index
    %c0_18 = arith.constant 0 : index
    %c0_19 = arith.constant 0 : index
    %42 = vector.load %arg5[%c1, %c0_18, %c0_19] : memref<2x16x128xf32, #tpu.memory_space<vmem>>, vector<1x16x128xf32>
    %43 = vector.shape_cast %42 : vector<1x16x128xf32> to vector<16x128xf32>
    %44 = vector.shape_cast %41 : vector<16x128xf32> to vector<1x16x128xf32>
    tpu.vector_store %arg5[%c1, %c0_18, %c0_19], %44 {strides = array<i32>} : memref<2x16x128xf32, #tpu.memory_space<vmem>>, vector<1x16x128xf32>,
    return
  }
  func.func @transform_0(%arg0: i32) -> (i32, i32) {
    %c0_i32 = arith.constant 0 : i32
    %c0_i32_0 = arith.constant 0 : i32
    return %arg0, %c0_i32 : i32, i32
  }
  func.func @transform_1(%arg0: i32) -> (i32, i32) {
    %c0_i32 = arith.constant 0 : i32
    %c0_i32_0 = arith.constant 0 : i32
    %c0_i32_1 = arith.constant 0 : i32
    return %c0_i32, %c0_i32_0 : i32, i32
  }
  func.func @transform_2(%arg0: i32) -> (i32, i32) {
    %c0_i32 = arith.constant 0 : i32
    %c0_i32_0 = arith.constant 0 : i32
    %c0_i32_1 = arith.constant 0 : i32
    return %c0_i32, %c0_i32_0 : i32, i32
  }
  func.func @transform_3(%arg0: i32) -> (i32, i32) {
    %c0_i32 = arith.constant 0 : i32
    %c0_i32_0 = arith.constant 0 : i32
    %c0_i32_1 = arith.constant 0 : i32
    return %c0_i32, %c0_i32_0 : i32, i32
  }
  func.func @transform_4(%arg0: i32) -> (i32, i32, i32) {
    %c0_i32 = arith.constant 0 : i32
    %c0_i32_0 = arith.constant 0 : i32
    %c0_i32_1 = arith.constant 0 : i32
    return %c0_i32, %arg0, %c0_i32_0 : i32, i32, i32
  }
}

</mosaic_0001>

<llo_original>
// kernel: tpu_custom_call.1
$region0: #{tpu_custom_call.1}
  #allocation0 [shape = 'u32[]', space=smem, size = 0x4, offset = 0x4, fixed_abs, tag = 'smem constant byte address 0x4 - core index']
  #allocation1 [shape = 'u32[144,128]{1,0:T(1,128)}', space=vmem, size = 0x12000, scoped, tag = 'internal scratch']
  %s0 = inlined_call_operand.hbm [shape: bf16[16,192], index: 0, kind: input, shape index: {}]
  %s1 = inlined_call_operand.hbm [shape: bf16[192,128], index: 1, kind: input, shape index: {}]
  %s2 = inlined_call_operand.vmem [shape: f32[1,128], index: 2, kind: input, shape index: {}]
  %s3 = inlined_call_operand.hbm [shape: bf16[128,128], index: 3, kind: input, shape index: {}]
  %s4 = inlined_call_operand.hbm [shape: f32[2,16,128], index: 4, kind: output, shape index: {}]
  %s5 = sld [smem:[#allocation0]]
  $region38: #{tpu_custom_call.1} parent=0
    _
  %s7 = ssub.s32 1, %s5
  %s8 = scalar_select 0, %s7, %s5
  $region1: #{tpu_custom_call.1} parent=0
    #allocation2 [shape = 'u8[8192]{0}', space=vmem, size = 0x2000, scoped, tag = 'input window, operand 0, single buffered']
    #allocation3 [shape = 's32[1]{0}', space=sflag, size = 0x4, scoped, tag = 'scoped memory for tpu_custom_call.1']
    #allocation4 [shape = 's32[1]{0}', space=sflag, size = 0x4, scoped, tag = 'scoped memory for tpu_custom_call.1']
    #allocation5 [shape = 'u8[49152]{0}', space=vmem, size = 0xc000, scoped, tag = 'input window, operand 1, single buffered']
    #allocation6 [shape = 's32[1]{0}', space=sflag, size = 0x4, scoped, tag = 'scoped memory for tpu_custom_call.1']
    #allocation7 [shape = 'u8[32768]{0}', space=vmem, size = 0x8000, scoped, tag = 'input window, operand 3, single buffered']
    #allocation8 [shape = 'u8[16384]{0}', space=vmem, size = 0x4000, scoped, tag = 'output window, operand 0, single buffered']
    %9 = vsyncpa [#allocation3], 0
    %10 = vsyncpa [#allocation6], 0
    %11 = vsyncpa [#allocation4], 0
    // Predicated region
    $region2: #{tpu_custom_call.1} parent=1 // pred_check
      _
    $region3: #{tpu_custom_call.1} parent=1 // pred_check_branch
      %13 = sbr.rel (0) target = $region5
    $region4: #{tpu_custom_call.1} parent=1 // pred_region
      %s15 = ssub.s32 256, 256
      %16 = vsyncadd [#allocation3], %s15
      %s17 = sshll.u32 [#allocation2], 4
      %s18 = int_to_ptr.vmem [resolvable:$true] %s17
      %23 = dma.hbm_to_vmem [thread:$0]  %s0, 256, %s18, [#allocation3], 128, 128, 8
    $region5: #{tpu_custom_call.1} parent=1 // pred_fallthru
      _
    // Predicated region
    $region6: #{tpu_custom_call.1} parent=1 // pred_check
      _
    $region7: #{tpu_custom_call.1} parent=1 // pred_check_branch
      %25 = sbr.rel (0) target = $region9
    $region8: #{tpu_custom_call.1} parent=1 // pred_region
      %s27 = ssub.s32 1536, 1536
      %28 = vsyncadd [#allocation6], %s27
      %s29 = sshll.u32 [#allocation5], 4
      %s30 = int_to_ptr.vmem [resolvable:$true] %s29
      %35 = dma.hbm_to_vmem [thread:$0]  %s1, 1536, %s30, [#allocation6], 64, 64, 4
    $region9: #{tpu_custom_call.1} parent=1 // pred_fallthru
      _
    // Predicated region
    $region10: #{tpu_custom_call.1} parent=1 // pred_check
      _
    $region11: #{tpu_custom_call.1} parent=1 // pred_check_branch
      %37 = sbr.rel (0) target = $region13
    $region12: #{tpu_custom_call.1} parent=1 // pred_region
      _
    $region13: #{tpu_custom_call.1} parent=1 // pred_fallthru
      _
    // Predicated region
    $region14: #{tpu_custom_call.1} parent=1 // pred_check
      _
    $region15: #{tpu_custom_call.1} parent=1 // pred_check_branch
      %39 = sbr.rel (0) target = $region17
    $region16: #{tpu_custom_call.1} parent=1 // pred_region
      %s41 = ssub.s32 1024, 1024
      %42 = vsyncadd [#allocation6], %s41
      %s43 = sshll.u32 [#allocation7], 4
      %s44 = int_to_ptr.vmem [resolvable:$true] %s43
      %49 = dma.hbm_to_vmem [thread:$0]  %s3, 1024, %s44, [#allocation6], 64, 64, 4
    $region17: #{tpu_custom_call.1} parent=1 // pred_fallthru
      _
    // Predicated region
    $region18: #{tpu_custom_call.1} parent=1 // pred_check
      _
    $region19: #{tpu_custom_call.1} parent=1 // pred_check_branch
      %51 = sbr.rel (0) target = $region21
    $region20: #{tpu_custom_call.1} parent=1 // pred_region
      %52 = dma.done [#allocation3], 256
    $region21: #{tpu_custom_call.1} parent=1 // pred_fallthru
      _
    // Predicated region
    $region22: #{tpu_custom_call.1} parent=1 // pred_check
      _
    $region23: #{tpu_custom_call.1} parent=1 // pred_check_branch
      %54 = sbr.rel (0) target = $region25
    $region24: #{tpu_custom_call.1} parent=1 // pred_region
      %55 = dma.done [#allocation6], 1536
    $region25: #{tpu_custom_call.1} parent=1 // pred_fallthru
      _
    // Predicated region
    $region26: #{tpu_custom_call.1} parent=1 // pred_check
      _
    $region27: #{tpu_custom_call.1} parent=1 // pred_check_branch
      %57 = sbr.rel (0) target = $region29
    $region28: #{tpu_custom_call.1} parent=1 // pred_region
      %58 = dma.done [#allocation6], 1024
    $region29: #{tpu_custom_call.1} parent=1 // pred_fallthru
      _
    %v60 = vld [vmem:[#allocation2] sm:$0xff]
    %v61 = vld [vmem:[#allocation2 + $0x8] sm:$0xff]
    %v62 = vld [vmem:[#allocation5] sm:$0xf]
    %v63 = vld [vmem:[#allocation5 + $0x4] sm:$0xf]
    %v64 = vld [vmem:[#allocation5 + $0x8] sm:$0xf]
    %v65 = vld [vmem:[#allocation5 + $0xc] sm:$0xf]
    %v66 = vld [vmem:[#allocation5 + $0x10] sm:$0xf]
    %v67 = vld [vmem:[#allocation5 + $0x14] sm:$0xf]
    %v68 = vld [vmem:[#allocation5 + $0x18] sm:$0xf]
    %v69 = vld [vmem:[#allocation5 + $0x1c] sm:$0xf]
    %v70 = vld [vmem:[#allocation5 + $0x20] sm:$0xf]
    %v71 = vld [vmem:[#allocation5 + $0x24] sm:$0xf]
    %v72 = vld [vmem:[#allocation5 + $0x28] sm:$0xf]
    %v73 = vld [vmem:[#allocation5 + $0x2c] sm:$0xf]
    %v74 = vld [vmem:[#allocation5 + $0x30] sm:$0xf]
    %v75 = vld [vmem:[#allocation5 + $0x34] sm:$0xf]
    %v76 = vld [vmem:[#allocation5 + $0x38] sm:$0xf]
    %v77 = vld [vmem:[#allocation5 + $0x3c] sm:$0xf]
    %v78 = vld [vmem:[#allocation5 + $0x40] sm:$0xf]
    %v79 = vld [vmem:[#allocation5 + $0x44] sm:$0xf]
    %v80 = vld [vmem:[#allocation5 + $0x48] sm:$0xf]
    %v81 = vld [vmem:[#allocation5 + $0x4c] sm:$0xf]
    %v82 = vld [vmem:[#allocation5 + $0x50] sm:$0xf]
    %v83 = vld [vmem:[#allocation5 + $0x54] sm:$0xf]
    %v84 = vld [vmem:[#allocation5 + $0x58] sm:$0xf]
    %v85 = vld [vmem:[#allocation5 + $0x5c] sm:$0xf]
    %v86 = vld [vmem:[%s2] sm:$0x1]
    %v88 = vlaneseq
    %v89 = vshrl.u32 %v88, 7
    %v90 = vsub.s32 0, %v89
    %v91 = vrot.slane %v86, %v90
    %v95 = vunpack.c.l.b16 %v60
    %v96 = vunpack.c.h.b16 %v60
    %v97 = vunpack.c.l.b16 %v61
    %v98 = vunpack.c.h.b16 %v61
    %v99 = vpack.c.b16 %v97, %v95
    %v100 = vpack.c.b16 %v98, %v96
    %v126 = vunpack.c.l.b16 %v62
    %v127 = vunpack.c.l.b16 %v63
    %v128 = vunpack.c.l.b16 %v64
    %v129 = vunpack.c.l.b16 %v65
    %v130 = vunpack.c.l.b16 %v66
    %v131 = vunpack.c.l.b16 %v67
    %v132 = vunpack.c.l.b16 %v68
    %v133 = vunpack.c.l.b16 %v69
    %v134 = vunpack.c.l.b16 %v70
    %v135 = vunpack.c.l.b16 %v71
    %v136 = vunpack.c.l.b16 %v72
    %v137 = vunpack.c.l.b16 %v73
    %v138 = vunpack.c.l.b16 %v74
    %v139 = vunpack.c.l.b16 %v75
    %v140 = vunpack.c.l.b16 %v76
    %v141 = vunpack.c.l.b16 %v77
    %v142 = vunpack.c.l.b16 %v78
    %v143 = vunpack.c.l.b16 %v79
    %v144 = vunpack.c.l.b16 %v80
    %v145 = vunpack.c.l.b16 %v81
    %v146 = vunpack.c.l.b16 %v82
    %v147 = vunpack.c.l.b16 %v83
    %v148 = vunpack.c.l.b16 %v84
    %v149 = vunpack.c.l.b16 %v85
    %v150 = vpack.c.b16 %v127, %v126
    %v151 = vpack.c.b16 %v129, %v128
    %v152 = vpack.c.b16 %v131, %v130
    %v153 = vpack.c.b16 %v133, %v132
    %v154 = vpack.c.b16 %v135, %v134
    %v155 = vpack.c.b16 %v137, %v136
    %v156 = vpack.c.b16 %v139, %v138
    %v157 = vpack.c.b16 %v141, %v140
    %v158 = vpack.c.b16 %v143, %v142
    %v159 = vpack.c.b16 %v145, %v144
    %v160 = vpack.c.b16 %v147, %v146
    %v161 = vpack.c.b16 %v149, %v148
    %vm174 = vcmask 523264
    %v176 = vsel %vm174, %v100, 0
    %178 = vmatprep.subr.bf16.mxu0 0
    %179 = vmatpush1.bf16.msra.mxu0 %v150
    %180 = vmatprep.subr.bf16.mxu0 0
    %181 = vmatpush1.bf16.msra.mxu0 %v151
    %182 = vmatprep.subr.bf16.mxu0 0
    %183 = vmatpush1.bf16.msra.mxu0 %v152
    %184 = vmatprep.subr.bf16.mxu0 0
    %185 = vmatpush1.bf16.msra.mxu0 %v153
    %186 = vmatprep.subr.bf16.mxu0 0
    %187 = vmatpush1.bf16.msra.mxu0 %v154
    %188 = vmatprep.subr.bf16.mxu0 0
    %189 = vmatpush1.bf16.msra.mxu0 %v155
    %190 = vmatprep.subr.bf16.mxu0 0
    %191 = vmatpush1.bf16.msra.mxu0 %v156
    %192 = vmatprep.subr.bf16.mxu0 0
    %193 = vmatpush1.bf16.msra.mxu0 %v157
    %194 = vmatprep.subr.bf16.mxu0 0
    %195 = vmatpush1.bf16.msra.mxu0 %v158
    %196 = vmatprep.subr.bf16.mxu0 0
    %197 = vmatpush1.bf16.msra.mxu0 %v159
    %198 = vmatprep.subr.bf16.mxu0 0
    %199 = vmatpush1.bf16.msra.mxu0 %v160
    %200 = vmatprep.subr.bf16.mxu0 0
    %201 = vmatpush1.bf16.msra.mxu0 %v161
    %202 = vmatprep.subr.bf16.mxu0 0
    %203 = vmatpush1.bf16.msra.mxu0 0
    %204 = vmatprep.subr.bf16.mxu0 0
    %205 = vmatpush1.bf16.msra.mxu0 0
    %206 = vmatprep.subr.bf16.mxu0 0
    %207 = vmatpush1.bf16.msra.mxu0 0
    %208 = vmatprep.subr.bf16.mxu0 0
    %209 = vmatpush1.bf16.msra.mxu0 0
    %210 = vmatprep.mubr.bf16.mxu0 %v176
    %211 = vmatmul.mubr.bf16.gmra.mrb[0].mxu0 %v99
    %v212 = vpop.f32.mrb[0].mxu0
    %v213 = vadd.f32 %v91, %v212
    %v214 = vpop.f32.mrb[0].mxu0
    %v215 = vpop.f32.mrb[0].mxu0
    %v216 = vadd.f32 %v91, %v215
    %v217 = vpop.f32.mrb[0].mxu0
    %218 = vdwg.mxu0
    %v219 = vpack.c.bf16 %v216, %v213
    %v220 = vtanh.bf16.pop %v219
    %v221 = vld [vmem:[#allocation7] sm:$0xf]
    %v222 = vld [vmem:[#allocation7 + $0x4] sm:$0xf]
    %v223 = vld [vmem:[#allocation7 + $0x8] sm:$0xf]
    %v224 = vld [vmem:[#allocation7 + $0xc] sm:$0xf]
    %v225 = vld [vmem:[#allocation7 + $0x10] sm:$0xf]
    %v226 = vld [vmem:[#allocation7 + $0x14] sm:$0xf]
    %v227 = vld [vmem:[#allocation7 + $0x18] sm:$0xf]
    %v228 = vld [vmem:[#allocation7 + $0x1c] sm:$0xf]
    %v229 = vld [vmem:[#allocation7 + $0x20] sm:$0xf]
    %v230 = vld [vmem:[#allocation7 + $0x24] sm:$0xf]
    %v231 = vld [vmem:[#allocation7 + $0x28] sm:$0xf]
    %v232 = vld [vmem:[#allocation7 + $0x2c] sm:$0xf]
    %v233 = vld [vmem:[#allocation7 + $0x30] sm:$0xf]
    %v234 = vld [vmem:[#allocation7 + $0x34] sm:$0xf]
    %v235 = vld [vmem:[#allocation7 + $0x38] sm:$0xf]
    %v236 = vld [vmem:[#allocation7 + $0x3c] sm:$0xf]
    %v253 = vunpack.c.l.b16 %v221
    %v254 = vunpack.c.l.b16 %v222
    %v255 = vunpack.c.l.b16 %v223
    %v256 = vunpack.c.l.b16 %v224
    %v257 = vunpack.c.l.b16 %v225
    %v258 = vunpack.c.l.b16 %v226
    %v259 = vunpack.c.l.b16 %v227
    %v260 = vunpack.c.l.b16 %v228
    %v261 = vunpack.c.l.b16 %v229
    %v262 = vunpack.c.l.b16 %v230
    %v263 = vunpack.c.l.b16 %v231
    %v264 = vunpack.c.l.b16 %v232
    %v265 = vunpack.c.l.b16 %v233
    %v266 = vunpack.c.l.b16 %v234
    %v267 = vunpack.c.l.b16 %v235
    %v268 = vunpack.c.l.b16 %v236
    %v269 = vpack.c.b16 %v254, %v253
    %v270 = vpack.c.b16 %v256, %v255
    %v271 = vpack.c.b16 %v258, %v257
    %v272 = vpack.c.b16 %v260, %v259
    %v273 = vpack.c.b16 %v262, %v261
    %v274 = vpack.c.b16 %v264, %v263
    %v275 = vpack.c.b16 %v266, %v265
    %v276 = vpack.c.b16 %v268, %v267
    %285 = vmatprep.subr.bf16.mxu0 0
    %286 = vmatpush1.bf16.msra.mxu0 %v269
    %287 = vmatprep.subr.bf16.mxu0 0
    %288 = vmatpush1.bf16.msra.mxu0 %v270
    %289 = vmatprep.subr.bf16.mxu0 0
    %290 = vmatpush1.bf16.msra.mxu0 %v271
    %291 = vmatprep.subr.bf16.mxu0 0
    %292 = vmatpush1.bf16.msra.mxu0 %v272
    %293 = vmatprep.subr.bf16.mxu0 0
    %294 = vmatpush1.bf16.msra.mxu0 %v273
    %295 = vmatprep.subr.bf16.mxu0 0
    %296 = vmatpush1.bf16.msra.mxu0 %v274
    %297 = vmatprep.subr.bf16.mxu0 0
    %298 = vmatpush1.bf16.msra.mxu0 %v275
    %299 = vmatprep.subr.bf16.mxu0 0
    %300 = vmatpush1.bf16.msra.mxu0 %v276
    %301 = vmatprep.subr.bf16.mxu0 0
    %302 = vmatpush1.bf16.msra.mxu0 0
    %303 = vmatprep.subr.bf16.mxu0 0
    %304 = vmatpush1.bf16.msra.mxu0 0
    %305 = vmatprep.subr.bf16.mxu0 0
    %306 = vmatpush1.bf16.msra.mxu0 0
    %307 = vmatprep.subr.bf16.mxu0 0
    %308 = vmatpush1.bf16.msra.mxu0 0
    %309 = vmatprep.subr.bf16.mxu0 0
    %310 = vmatpush1.bf16.msra.mxu0 0
    %311 = vmatprep.subr.bf16.mxu0 0
    %312 = vmatpush1.bf16.msra.mxu0 0
    %313 = vmatprep.subr.bf16.mxu0 0
    %314 = vmatpush1.bf16.msra.mxu0 0
    %315 = vmatprep.subr.bf16.mxu0 0
    %316 = vmatpush1.bf16.msra.mxu0 0
    %317 = vmatprep.mubr.bf16.mxu0 0
    %318 = vmatmul.mubr.bf16.gmra.mrb[0].mxu0 %v220
    %v319 = vpop.f32.mrb[0].mxu0
    %v320 = vadd.f32 0.0, %v319
    %v321 = vpop.f32.mrb[0].mxu0
    %v322 = vpop.f32.mrb[0].mxu0
    %v323 = vadd.f32 0.0, %v322
    %v324 = vpop.f32.mrb[0].mxu0
    %325 = vdwg.mxu0
    %v326 = vlaneseq
    %v327 = vand.u32 %v326, 127
    %vm328 = vcmp.lt.s32.totalorder %v327, 5
    %v329 = vsel %vm328, %v320, -inf
    %v330 = vsel %vm328, %v323, -inf
    %331 = vmax.xlane.f32.xlu0 %v329
    %v332 = vpop.xlane.xlu0 %331
    %333 = vmax.xlane.f32.xlu0 %v330
    %v334 = vpop.xlane.xlu0 %333
    %v335 = vsub.f32 %v329, %v332
    %v336 = vsub.f32 %v330, %v334
    %v337 = vmul.f32 %v335, 1.442695
    %v338 = vpow.pop %v337
    %v339 = vmul.f32 %v336, 1.442695
    %v340 = vpow.pop %v339
    %341 = vadd.xlane.f32.xlu0 %v338
    %v342 = vpop.xlane.xlu0 %341
    %343 = vadd.xlane.f32.xlu0 %v340
    %v344 = vpop.xlane.xlu0 %343
    %v345 = vrcp.pop %v342
    %v346 = vmul.f32 %v338, %v345
    %v347 = vrcp.pop %v344
    %v348 = vmul.f32 %v340, %v347
    %v349 = vsub.s32 4, %v327
    %v350 = vcvt.s32.f32 %v349
    %v351 = vmul.f32 %v350, 0.25
    %v352 = vsel %vm328, %v351, 0.0
    %v353 = vmul.f32 %v346, %v352
    %v354 = vmul.f32 %v348, %v352
    %355 = vadd.xlane.f32.xlu0 %v353
    %v356 = vpop.xlane.xlu0 %355
    %357 = vadd.xlane.f32.xlu0 %v354
    %v358 = vpop.xlane.xlu0 %357
    %359 = vst [vmem:[#allocation8] sm:$0xff] %v320
    %360 = vst [vmem:[#allocation8 + $0x8] sm:$0xff] %v323
    %vm361 = vcmp.eq.s32.totalorder %v327, 5
    %v362 = vsel %vm361, %v356, %v346
    %v363 = vsel %vm361, %v358, %v348
    %s364 = scalar_lea.vmem [#allocation8], 16
    %365 = vst [vmem:[%s364] sm:$0xff] %v362
    %366 = vst [vmem:[%s364 + $0x8] sm:$0xff] %v363
    // Predicated region
    $region30: #{tpu_custom_call.1} parent=1 // pred_check
      _
    $region31: #{tpu_custom_call.1} parent=1 // pred_check_branch
      %368 = sbr.rel (0) target = $region33
    $region32: #{tpu_custom_call.1} parent=1 // pred_region
      %s370 = ssub.s32 512, 512
      %371 = vsyncadd [#allocation4], %s370
      %s372 = sshll.u32 [#allocation8], 4
      %s373 = int_to_ptr.vmem [resolvable:$true] %s372
      %378 = dma.vmem_to_hbm [thread:$0]  %s373, 512, %s4, [#allocation4], 128, 128, 8
    $region33: #{tpu_custom_call.1} parent=1 // pred_fallthru
      _
    // Predicated region
    $region34: #{tpu_custom_call.1} parent=1 // pred_check
      _
    $region35: #{tpu_custom_call.1} parent=1 // pred_check_branch
      %380 = sbr.rel (0) target = $region37
    $region36: #{tpu_custom_call.1} parent=1 // pred_region
      %381 = dma.done [#allocation4], 512
    $region37: #{tpu_custom_call.1} parent=1 // pred_fallthru
      _
    %382 = vsyncpa [#allocation3], 1
    %383 = vsyncpa [#allocation6], 1
    %384 = vsyncpa [#allocation4], 1

</llo_original>
